<compile_context>
chip_gen: v7x
topology: tpu7x:2x2x1
jax: 0.10.0
libtpu: 0.0.40
codegen_flags: <defaults>
</compile_context>

<pallas_src>
import math
import jax
import jax.numpy as jnp
from jax.experimental import pallas as pl
from jax.experimental.pallas import tpu as pltpu


def _patch_embed_kernel(x_ref, w_ref, b_ref, o_ref):
    # x_ref: (C, tp, ps)  w_ref: (C, ps, E)  b_ref: (1, E) f32  o_ref: (tp, E)
    # C is tiny (e.g. 3) -> static unroll; each dot is (tp, ps) @ (ps, E) on the
    # MXU with f32 accumulation.  The narrow K feed is irrelevant: HBM-bound.
    n_chan = x_ref.shape[0]
    acc = jnp.dot(x_ref[0], w_ref[0], preferred_element_type=jnp.float32)
    for c in range(1, n_chan):
        acc += jnp.dot(x_ref[c], w_ref[c], preferred_element_type=jnp.float32)
    o_ref[...] = (acc + b_ref[...]).astype(o_ref.dtype)


def _physical_vmem_bytes():
    try:
        info = pltpu.get_tpu_info()
        v = getattr(info, "vmem_capacity_bytes", None)
        if v:
            return int(v)
    except Exception:
        pass
    return 64 * 2**20  # conservative fallback (v7x-sized)


def _round_up(x, m):
    return -(-x // m) * m


def _choose_tp(batch, num_patches, target_tokens, sub):
    """Patches per grid step.  Keeps >= 2 total grid steps when possible so the
    'parallel' grid axes give both v7x TensorCores work (neutral on v5e/v6e)."""
    target = max(int(target_tokens), sub)
    if num_patches > target:
        return max(sub, (target // sub) * sub)
    if batch == 1 and num_patches >= 2 * sub:
        # Split the patch axis instead of collapsing to a 1-step grid.
        return _round_up(-(-num_patches // 2), sub)
    return num_patches


def patch_embed_pallas(x, weight, bias, patch_size, *, block_tokens=2048,
                       signal_length=None):
    """x: [B, C, L]; weight: [E, C, patch_size] (torch Conv1d layout); bias: [E].

    Returns [B, L // patch_size, E] in x.dtype (matches PatchEmbed.forward).
    Pass bf16 x for ~2x throughput on this memory-bound op (f32 accumulation is
    kept inside the kernel regardless).
    """
    B, C, L = x.shape
    E = weight.shape[0]
    ps = patch_size
    if signal_length is not None and L != signal_length:
        raise ValueError(
            f"Input signal length {L} doesn't match expected length {signal_length}")
    if L % ps != 0:
        # Conv1d with stride == kernel_size silently drops the tail; match it.
        # (Only in this rare case does the wrapper copy x.)
        L = (L // ps) * ps
        x = x[:, :, :L]
    P = L // ps

    in_dtype = x.dtype
    in_bytes = jnp.dtype(in_dtype).itemsize
    sub = 8 if in_bytes >= 4 else (16 if in_bytes == 2 else 32)

    # Lane-dense output: pad only the (tiny) weight/bias E dim up to a multiple
    # of 128 when embed_dim isn't aligned, so output stores are unmasked vst.
    # Never pad the K = C*ps contraction (would inflate x HBM traffic ~2.7x).
    E_pad = _round_up(E, 128) if E % 128 else E

    # Free bitcast "unfold": [B, C, L] -> [B, C, P, ps].  No HBM copy; the
    # per-tile DMA does the actual patch gather.
    x4 = x.reshape(B, C, P, ps)

    # Conv1d weight [E, C, ps] -> [C, ps, E_pad], VMEM-resident; bias -> f32 once.
    w3 = jnp.transpose(weight, (1, 2, 0)).astype(in_dtype)
    b2 = bias.astype(jnp.float32).reshape(1, E)
    if E_pad != E:
        w3 = jnp.pad(w3, ((0, 0), (0, 0), (0, E_pad - E)))
        b2 = jnp.pad(b2, ((0, 0), (0, E_pad - E)))

    # ---- patch-axis tiling -------------------------------------------------
    tp = _choose_tp(B, P, block_tokens, sub)

    phys_vmem = _physical_vmem_bytes()
    vmem_cap = min(int(0.45 * phys_vmem), 32 * 2**20)  # tile budget ceiling

    ps_lanes = max(_round_up(ps, 128), 128)  # VMEM lane padding of the x tile

    def _tile_bytes(t):
        rs = _round_up(t, sub)
        xb = 2 * C * rs * ps_lanes * in_bytes            # double-buffered x tile
        ob = 2 * rs * E_pad * in_bytes                    # double-buffered out tile
        ab = _round_up(t, 8) * E_pad * 4                  # f32 accumulator temp
        wb = 2 * C * _round_up(ps, sub) * E_pad * in_bytes  # resident weights
        bb = 2 * 8 * E_pad * 4                            # bias
        return xb + ob + ab + wb + bb

    while _tile_bytes(tp) > vmem_cap and tp > sub:
        tp = max(sub, ((tp // 2) // sub) * sub)

    grid = (B, pl.cdiv(P, tp))
    vmem_limit = int(min(max(int(1.5 * _tile_bytes(tp)), 16 * 2**20),
                         int(0.7 * phys_vmem)))

    cost = pl.CostEstimate(
        flops=2 * B * P * C * ps * E_pad,
        transcendentals=0,
        bytes_accessed=(B * C * P * ps + C * ps * E_pad) * in_bytes
        + E_pad * 4 + B * P * E_pad * in_bytes,
    )

    out = pl.pallas_call(
        _patch_embed_kernel,
        out_shape=jax.ShapeDtypeStruct((B, P, E_pad), in_dtype),
        grid=grid,
        in_specs=[
            # x tile: one batch element, all channels, tp patches (DMA = unfold).
            pl.BlockSpec((None, C, tp, ps), lambda i, j: (i, 0, j, 0)),
            # weights / bias: constant index map -> VMEM-resident across steps.
            pl.BlockSpec((C, ps, E_pad), lambda i, j: (0, 0, 0)),
            pl.BlockSpec((1, E_pad), lambda i, j: (0, 0)),
        ],
        out_specs=pl.BlockSpec((None, tp, E_pad), lambda i, j: (i, j, 0)),
        compiler_params=pltpu.CompilerParams(
            dimension_semantics=("parallel", "parallel"),
            vmem_limit_bytes=vmem_limit,
        ),
        cost_estimate=cost,
    )(x4, w3, b2)

    if E_pad != E:
        # Only taken when embed_dim isn't a multiple of 128 (default 768 is).
        out = out[..., :E]
    return out


def init_patch_embed_params(key, in_chans, embed_dim, patch_size,
                            dtype=jnp.float32):
    """Deterministic init mimicking nn.Conv1d defaults (uniform +/- 1/sqrt(fan_in))."""
    kw, kb = jax.random.split(key)
    fan_in = in_chans * patch_size
    bound = 1.0 / math.sqrt(fan_in)
    w = jax.random.uniform(kw, (embed_dim, in_chans, patch_size), dtype,
                           minval=-bound, maxval=bound)
    b = jax.random.uniform(kb, (embed_dim,), dtype,
                           minval=-bound, maxval=bound)
    return w, b


if __name__ == "__main__":
    # Small, module-consistent shapes: batch=2, in_chans=3, patch_size=16,
    # signal_length=208 -> num_patches=13; embed_dim=128 (lane-aligned output).
    B_, C_, PS, NP, E_ = 2, 3, 16, 13, 128
    L_ = PS * NP
    key = jax.random.PRNGKey(0)
    kx, kp = jax.random.split(key)

    x = jax.random.normal(kx, (B_, C_, L_), dtype=jnp.float32)
    w, b = init_patch_embed_params(kp, C_, E_, PS)

    # Reference: Conv1d(kernel=stride=patch_size) == per-patch linear projection.
    x_p = x.reshape(B_, C_, NP, PS)
    y_ref = jnp.einsum("bcpk,eck->bpe", x_p, w,
                       precision=jax.lax.Precision.HIGHEST) + b

    # 1) default tiling: whole-P tiles, grid = (B, 1) = 2 parallel steps.
    y = patch_embed_pallas(x, w, b, PS, signal_length=L_)
    jax.block_until_ready(y)
    assert y.shape == (B_, NP, E_)
    assert jnp.allclose(y, y_ref, atol=2e-3, rtol=2e-3)

    # 2) tiny block_tokens -> multi-step grid with a ragged boundary tile along
    #    the patch axis (exercises the implicit tail handling that replaced jnp.pad).
    y2 = patch_embed_pallas(x, w, b, PS, block_tokens=8)
    jax.block_until_ready(y2)
    assert jnp.allclose(y2, y_ref, atol=2e-3, rtol=2e-3)

    # 3) bf16 input path (halves HBM bytes for this memory-bound op; f32 accum).
    y3 = patch_embed_pallas(x.astype(jnp.bfloat16), w, b, PS)
    jax.block_until_ready(y3)
    assert y3.dtype == jnp.bfloat16
    assert jnp.allclose(y3.astype(jnp.float32), y_ref, atol=5e-2, rtol=5e-2)

    print("KERNEL_OK")
</pallas_src>

<mosaic_0001>
module attributes {stable_mosaic.version = 11 : i64} {
  func.func @_patch_embed_kernel(%arg0: i32, %arg1: i32, %arg2: memref<1x3x13x16xf32, #tpu.memory_space<vmem>>, %arg3: memref<3x16x128xf32, #tpu.memory_space<vmem>>, %arg4: memref<1x128xf32, #tpu.memory_space<vmem>>, %arg5: memref<1x13x128xf32, #tpu.memory_space<vmem>>) attributes {dimension_semantics = [#tpu.dimension_semantics<parallel>, #tpu.dimension_semantics<parallel>], iteration_bounds = array<i64: 2, 1>, scalar_prefetch = 0 : i64, scratch_operands = 0 : i64, tpu.core_type = #tpu.core_type<tc>, window_params = [{transform_indices = @transform_0, window_bounds = array<i64: 1, 3, 13, 16>}, {pipeline_mode = #tpu.pipeline_mode<synchronous>, transform_indices = @transform_1, window_bounds = array<i64: 3, 16, 128>}, {pipeline_mode = #tpu.pipeline_mode<synchronous>, transform_indices = @transform_2, window_bounds = array<i64: 1, 128>}, {transform_indices = @transform_3, window_bounds = array<i64: 1, 13, 128>}]} {
    %c0 = arith.constant 0 : index
    %c0_0 = arith.constant 0 : index
    %c0_1 = arith.constant 0 : index
    %c0_2 = arith.constant 0 : index
    %0 = vector.load %arg2[%c0, %c0_0, %c0_1, %c0_2] : memref<1x3x13x16xf32, #tpu.memory_space<vmem>>, vector<1x1x13x16xf32>
    %1 = vector.shape_cast %0 : vector<1x1x13x16xf32> to vector<13x16xf32>
    %c0_3 = arith.constant 0 : index
    %c0_4 = arith.constant 0 : index
    %c0_5 = arith.constant 0 : index
    %2 = vector.load %arg3[%c0_3, %c0_4, %c0_5] : memref<3x16x128xf32, #tpu.memory_space<vmem>>, vector<1x16x128xf32>
    %3 = vector.shape_cast %2 : vector<1x16x128xf32> to vector<16x128xf32>
    %cst = arith.constant dense<0.000000e+00> : vector<13x128xf32>
    %4 = tpu.matmul %1, %3, %cst {dimension_numbers = #tpu.dot_dimension_numbers<[1], [0], [0], [1], [0, 0, 1, 1], [], []>} : vector<13x16xf32>, vector<16x128xf32>, vector<13x128xf32> -> vector<13x128xf32>
    %c0_6 = arith.constant 0 : index
    %c1 = arith.constant 1 : index
    %c0_7 = arith.constant 0 : index
    %c0_8 = arith.constant 0 : index
    %5 = vector.load %arg2[%c0_6, %c1, %c0_7, %c0_8] : memref<1x3x13x16xf32, #tpu.memory_space<vmem>>, vector<1x1x13x16xf32>
    %6 = vector.shape_cast %5 : vector<1x1x13x16xf32> to vector<13x16xf32>
    %c1_9 = arith.constant 1 : index
    %c0_10 = arith.constant 0 : index
    %c0_11 = arith.constant 0 : index
    %7 = vector.load %arg3[%c1_9, %c0_10, %c0_11] : memref<3x16x128xf32, #tpu.memory_space<vmem>>, vector<1x16x128xf32>
    %8 = vector.shape_cast %7 : vector<1x16x128xf32> to vector<16x128xf32>
    %cst_12 = arith.constant dense<0.000000e+00> : vector<13x128xf32>
    %9 = tpu.matmul %6, %8, %cst_12 {dimension_numbers = #tpu.dot_dimension_numbers<[1], [0], [0], [1], [0, 0, 1, 1], [], []>} : vector<13x16xf32>, vector<16x128xf32>, vector<13x128xf32> -> vector<13x128xf32>
    %10 = arith.addf %4, %9 : vector<13x128xf32>
    %c0_13 = arith.constant 0 : index
    %c2 = arith.constant 2 : index
    %c0_14 = arith.constant 0 : index
    %c0_15 = arith.constant 0 : index
    %11 = vector.load %arg2[%c0_13, %c2, %c0_14, %c0_15] : memref<1x3x13x16xf32, #tpu.memory_space<vmem>>, vector<1x1x13x16xf32>
    %12 = vector.shape_cast %11 : vector<1x1x13x16xf32> to vector<13x16xf32>
    %c2_16 = arith.constant 2 : index
    %c0_17 = arith.constant 0 : index
    %c0_18 = arith.constant 0 : index
    %13 = vector.load %arg3[%c2_16, %c0_17, %c0_18] : memref<3x16x128xf32, #tpu.memory_space<vmem>>, vector<1x16x128xf32>
    %14 = vector.shape_cast %13 : vector<1x16x128xf32> to vector<16x128xf32>
    %cst_19 = arith.constant dense<0.000000e+00> : vector<13x128xf32>
    %15 = tpu.matmul %12, %14, %cst_19 {dimension_numbers = #tpu.dot_dimension_numbers<[1], [0], [0], [1], [0, 0, 1, 1], [], []>} : vector<13x16xf32>, vector<16x128xf32>, vector<13x128xf32> -> vector<13x128xf32>
    %16 = arith.addf %10, %15 : vector<13x128xf32>
    %c0_20 = arith.constant 0 : index
    %c0_21 = arith.constant 0 : index
    %17 = vector.load %arg4[%c0_20, %c0_21] : memref<1x128xf32, #tpu.memory_space<vmem>>, vector<1x128xf32>
    %18 = vector.broadcast %17 : vector<1x128xf32> to vector<13x128xf32>
    %19 = arith.addf %16, %18 : vector<13x128xf32>
    %c0_22 = arith.constant 0 : index
    %c0_23 = arith.constant 0 : index
    %c0_24 = arith.constant 0 : index
    %20 = vector.load %arg5[%c0_22, %c0_23, %c0_24] : memref<1x13x128xf32, #tpu.memory_space<vmem>>, vector<1x13x128xf32>
    %21 = vector.shape_cast %20 : vector<1x13x128xf32> to vector<13x128xf32>
    %22 = vector.shape_cast %19 : vector<13x128xf32> to vector<1x13x128xf32>
    tpu.vector_store %arg5[%c0_22, %c0_23, %c0_24], %22 {strides = array<i32>} : memref<1x13x128xf32, #tpu.memory_space<vmem>>, vector<1x13x128xf32>,
    return
  }
  func.func @transform_0(%arg0: i32, %arg1: i32) -> (i32, i32, i32, i32) {
    %c0_i32 = arith.constant 0 : i32
    %c0_i32_0 = arith.constant 0 : i32
    %c0_i32_1 = arith.constant 0 : i32
    return %arg0, %c0_i32, %arg1, %c0_i32_0 : i32, i32, i32, i32
  }
  func.func @transform_1(%arg0: i32, %arg1: i32) -> (i32, i32, i32) {
    %c0_i32 = arith.constant 0 : i32
    %c0_i32_0 = arith.constant 0 : i32
    %c0_i32_1 = arith.constant 0 : i32
    %c0_i32_2 = arith.constant 0 : i32
    return %c0_i32, %c0_i32_0, %c0_i32_1 : i32, i32, i32
  }
  func.func @transform_2(%arg0: i32, %arg1: i32) -> (i32, i32) {
    %c0_i32 = arith.constant 0 : i32
    %c0_i32_0 = arith.constant 0 : i32
    %c0_i32_1 = arith.constant 0 : i32
    return %c0_i32, %c0_i32_0 : i32, i32
  }
  func.func @transform_3(%arg0: i32, %arg1: i32) -> (i32, i32, i32) {
    %c0_i32 = arith.constant 0 : i32
    %c0_i32_0 = arith.constant 0 : i32
    return %arg0, %arg1, %c0_i32 : i32, i32, i32
  }
}

</mosaic_0001>

<llo_original>
// kernel: tpu_custom_call.1
$region0: #{tpu_custom_call.1}
  #allocation0 [shape = 'u32[]', space=smem, size = 0x4, offset = 0x4, fixed_abs, tag = 'smem constant byte address 0x4 - core index']
  #allocation1 [shape = 'u32[144,128]{1,0:T(1,128)}', space=vmem, size = 0x12000, scoped, tag = 'internal scratch']
  %s0 = inlined_call_operand.vmem [shape: f32[2,3,13,16], index: 0, kind: input, shape index: {}]
  %s1 = inlined_call_operand.vmem [shape: f32[3,16,128], index: 1, kind: input, shape index: {}]
  %s2 = inlined_call_operand.vmem [shape: f32[1,128], index: 2, kind: input, shape index: {}]
  %s3 = inlined_call_operand.vmem [shape: f32[2,13,128], index: 3, kind: output, shape index: {}]
  %s4 = sld [smem:[#allocation0]]
  $region45: #{tpu_custom_call.1} parent=0
    _
  %s6 = ssub.s32 1, %s4
  %s7 = scalar_select 0, %s6, %s4
  loop: start=0, step=1, limit=4
  $region2: #{tpu_custom_call.1} parent=0 // loop_pre_header
    _
  $region3: #{tpu_custom_call.1} parent=0 // loop_header
    %s9 = sphi 0, %s13
    %p10 = scmp.ge.s32.totalorder %s9, 4
    %s16 = sphi 0, %s28
    %s17 = sphi 0, %s24
    %s18 = sphi 0, %s16
    %s19 = sphi 0, %s17
    %s20 = sphi 0, %s18
    %s21 = sphi 0, %s19
    %s33 = sphi 0, %s35
    %s36 = sphi 0, %s33
    %s37 = sphi 0, %s36
    %s53 = sphi 0, %s37
    %s57 = sphi 0, %s57
    %s59 = sphi 0, %s57
    %s60 = sphi 0, %s59
    %s74 = sphi 0, %s60
    %s78 = sphi 0, %s78
    %s80 = sphi 0, %s78
    %s81 = sphi 0, %s80
    %s95 = sphi 0, %s81
    %s103 = sphi 0, %s105
    %s106 = sphi 0, %s103
    %s107 = sphi 0, %s106
    %s123 = sphi 0, %s107
  $region4: #{tpu_custom_call.1} parent=0 // loop_header_branch
    %12 = sbr.rel (%p10) target = $region8
  $region5: #{tpu_custom_call.1} parent=0 // loop_body
    %s14 = ssub.s32 %s9, 1
    %s15 = ssub.s32 %s9, 2
    %s22 = sadd.s32 1, %s17
    %p23 = scmp.ge.s32.totalorder %s22, 1
    %s24 = scalar_select %p23, 0, %s22
    %s25 = sadd.s32 1, %s16
    %s26 = scalar_select %p23, %s25, %s16
    %p27 = scmp.ge.s32.totalorder %s26, 2
    %s28 = scalar_select %p27, 0, %s26
    %s29 = ssub.s32 %s16, %s28
    %s30 = ssub.s32 %s17, %s24
    %s31 = sor.u32 %s29, %s30
    %p32 = scmp.eq.s32.totalorder %s31, 0
    %s34 = sadd.s32 %s33, 1
    %s35 = scalar_select %p32, %s33, %s34
    %p38 = pneg %p32
    %p39 = scmp.eq.s32.totalorder %s9, 1
    %p40 = por %p38, %p39
    %p41 = scmp.ne.s32.totalorder %s33, %s36
    %p42 = scmp.eq.s32.totalorder %s9, 0
    %p43 = por %p41, %p42
    %p44 = scmp.ne.s32.totalorder %s33, %s36
    %p45 = scmp.eq.s32.totalorder %s14, 1
    %p46 = por %p44, %p45
    %p47 = scmp.ne.s32.totalorder %s36, %s37
    %p48 = scmp.eq.s32.totalorder %s14, 0
    %p49 = por %p47, %p48
    %p50 = scmp.ne.s32.totalorder %s36, %s37
    %p51 = scmp.eq.s32.totalorder %s15, 1
    %p52 = por %p50, %p51
    %p54 = scmp.ne.s32.totalorder %s37, %s53
    %p55 = scmp.eq.s32.totalorder %s15, 0
    %p56 = por %p54, %p55
    %s58 = sadd.s32 %s57, 1
    %p61 = scmp.eq.s32.totalorder %s9, 1
    %p62 = scmp.ne.s32.totalorder %s57, %s59
    %p63 = scmp.eq.s32.totalorder %s9, 0
    %p64 = por %p62, %p63
    %p65 = scmp.ne.s32.totalorder %s57, %s59
    %p66 = scmp.eq.s32.totalorder %s14, 1
    %p67 = por %p65, %p66
    %p68 = scmp.ne.s32.totalorder %s59, %s60
    %p69 = scmp.eq.s32.totalorder %s14, 0
    %p70 = por %p68, %p69
    %p71 = scmp.ne.s32.totalorder %s59, %s60
    %p72 = scmp.eq.s32.totalorder %s15, 1
    %p73 = por %p71, %p72
    %p75 = scmp.ne.s32.totalorder %s60, %s74
    %p76 = scmp.eq.s32.totalorder %s15, 0
    %p77 = por %p75, %p76
    %s79 = sadd.s32 %s78, 1
    %p82 = scmp.eq.s32.totalorder %s9, 1
    %p83 = scmp.ne.s32.totalorder %s78, %s80
    %p84 = scmp.eq.s32.totalorder %s9, 0
    %p85 = por %p83, %p84
    %p86 = scmp.ne.s32.totalorder %s78, %s80
    %p87 = scmp.eq.s32.totalorder %s14, 1
    %p88 = por %p86, %p87
    %p89 = scmp.ne.s32.totalorder %s80, %s81
    %p90 = scmp.eq.s32.totalorder %s14, 0
    %p91 = por %p89, %p90
    %p92 = scmp.ne.s32.totalorder %s80, %s81
    %p93 = scmp.eq.s32.totalorder %s15, 1
    %p94 = por %p92, %p93
    %p96 = scmp.ne.s32.totalorder %s81, %s95
    %p97 = scmp.eq.s32.totalorder %s15, 0
    %p98 = por %p96, %p97
    %s99 = ssub.s32 %s16, %s28
    %s100 = ssub.s32 %s17, %s24
    %s101 = sor.u32 %s99, %s100
    %p102 = scmp.eq.s32.totalorder %s101, 0
    %s104 = sadd.s32 %s103, 1
    %s105 = scalar_select %p102, %s103, %s104
    %p108 = pneg %p102
    %p109 = scmp.eq.s32.totalorder %s9, 1
    %p110 = por %p108, %p109
    %p111 = scmp.ne.s32.totalorder %s103, %s106
    %p112 = scmp.eq.s32.totalorder %s9, 0
    %p113 = por %p111, %p112
    %p114 = scmp.ne.s32.totalorder %s103, %s106
    %p115 = scmp.eq.s32.totalorder %s14, 1
    %p116 = por %p114, %p115
    %p117 = scmp.ne.s32.totalorder %s106, %s107
    %p118 = scmp.eq.s32.totalorder %s14, 0
    %p119 = por %p117, %p118
    %p120 = scmp.ne.s32.totalorder %s106, %s107
    %p121 = scmp.eq.s32.totalorder %s15, 1
    %p122 = por %p120, %p121
    %p124 = scmp.ne.s32.totalorder %s107, %s123
    %p125 = scmp.eq.s32.totalorder %s15, 0
    %p126 = por %p124, %p125
    %p127 = scmp.le.s32.totalorder 1, %s9
    %p128 = scmp.lt.s32.totalorder %s9, 3
    %p129 = pnand %p127, %p128
    %p130 = pneg %p129
    // Predicated region
    $region9: #{tpu_custom_call.1} parent=5 // pred_check
      _
    $region10: #{tpu_custom_call.1} parent=5 // pred_check_branch
      %132 = sbr.rel (%p129) target = $region12
    $region11: #{tpu_custom_call.1} parent=5 // pred_region
      %s133 = ssub.s32 %s9, 1
      // Predicated region
      $region13: #{tpu_custom_call.1} parent=11 // pred_check
        %p134 = pneg %p70
      $region14: #{tpu_custom_call.1} parent=11 // pred_check_branch
        %136 = sbr.rel (%p134) target = $region16
      $region15: #{tpu_custom_call.1} parent=11 // pred_region
        _
      $region16: #{tpu_custom_call.1} parent=11 // pred_fallthru
        _
      // Predicated region
      $region17: #{tpu_custom_call.1} parent=11 // pred_check
        %p137 = pneg %p91
      $region18: #{tpu_custom_call.1} parent=11 // pred_check_branch
        %139 = sbr.rel (%p137) target = $region20
      $region19: #{tpu_custom_call.1} parent=11 // pred_region
        _
      $region20: #{tpu_custom_call.1} parent=11 // pred_fallthru
        _
    $region12: #{tpu_custom_call.1} parent=5 // pred_fallthru
      _
    %p140 = scmp.lt.s32.totalorder %s9, 2
    // Predicated region
    $region21: #{tpu_custom_call.1} parent=5 // pred_check
      %p141 = pneg %p140
    $region22: #{tpu_custom_call.1} parent=5 // pred_check_branch
      %143 = sbr.rel (%p141) target = $region24
    $region23: #{tpu_custom_call.1} parent=5 // pred_region
      // Predicated region
      $region25: #{tpu_custom_call.1} parent=23 // pred_check
        %p144 = pneg %p43
      $region26: #{tpu_custom_call.1} parent=23 // pred_check_branch
        %146 = sbr.rel (%p144) target = $region28
      $region27: #{tpu_custom_call.1} parent=23 // pred_region
        %s147 = smul.u32 2, %s17
        %p148 = scmp.lt.s32.totalorder %s16, 1
        %s149 = scalar_select %p148, %s16, 1
        %p150 = scmp.lt.s32.totalorder %s147, 1
        %s151 = scalar_select %p150, %s147, 1
        %s152 = smul.addr %s149, 6
        %s153 = sadd.s32 %s151, %s152
        %s154 = smul.addr %s153, 8
        %s155 = scalar_lea.vmem %s0, %s154
        %s156 = smul.u32 2, %s17
      $region28: #{tpu_custom_call.1} parent=23 // pred_fallthru
        _
    $region24: #{tpu_custom_call.1} parent=5 // pred_fallthru
      _
    %p157 = scmp.le.s32.totalorder 1, %s9
    %p158 = scmp.lt.s32.totalorder %s9, 3
    %p159 = pnand %p157, %p158
    %p160 = pneg %p159
    // Predicated region
    $region29: #{tpu_custom_call.1} parent=5 // pred_check
      _
    $region30: #{tpu_custom_call.1} parent=5 // pred_check_branch
      %162 = sbr.rel (%p159) target = $region32
    $region31: #{tpu_custom_call.1} parent=5 // pred_region
      %s163 = ssub.s32 %s9, 1
      %s164 = smul.u32 2, %s19
      %p165 = scmp.lt.s32.totalorder %s18, 1
      %s166 = scalar_select %p165, %s18, 1
      %p167 = scmp.lt.s32.totalorder %s164, 1
      %s168 = scalar_select %p167, %s164, 1
      %s169 = smul.addr %s166, 6
      %s170 = sadd.s32 %s168, %s169
      %s171 = smul.addr %s170, 8
      %s172 = scalar_lea.vmem %s0, %s171
      %p173 = pneg %p49
      %p174 = pneg %p46
      %p175 = pneg %p70
      %p176 = pneg %p67
      %p177 = pneg %p91
      %p178 = pneg %p88
      %p179 = pneg %p119
      %p180 = pneg %p116
      %s181 = smul.u32 2, %s19
      %p182 = scmp.lt.s32.totalorder %s18, 1
      %s183 = scalar_select %p182, %s18, 1
      %p184 = scmp.lt.s32.totalorder %s181, 1
      %s185 = scalar_select %p184, %s181, 1
      %s186 = smul.addr %s183, 2
      %s187 = sadd.s32 %s185, %s186
      %s188 = smul.addr %s187, 8
      %s189 = scalar_lea.vmem %s3, %s188
      %s190 = smul.u32 2, %s19
      %p191 = scmp.lt.s32.totalorder %s18, 1
      %s192 = scalar_select %p191, %s18, 1
      %p193 = scmp.lt.s32.totalorder %s190, 1
      %s194 = scalar_select %p193, %s190, 1
      %s195 = smul.addr %s192, 6
      %s196 = sadd.s32 %s194, %s195
      %s197 = smul.addr %s196, 8
      %s198 = scalar_lea.vmem %s0, %s197
      %s199 = smul.u32 2, %s19
      %s200 = smul.u32 2, %s19
      %p201 = scmp.lt.s32.totalorder %s18, 1
      %s202 = scalar_select %p201, %s18, 1
      %p203 = scmp.lt.s32.totalorder %s200, 1
      %s204 = scalar_select %p203, %s200, 1
      %s205 = smul.addr %s202, 2
      %s206 = sadd.s32 %s204, %s205
      %s207 = smul.addr %s206, 8
      %s208 = scalar_lea.vmem %s3, %s207
      %s209 = smul.u32 2, %s19
      %v210 = vld [vmem:[%s198] sm:$0xff]
      %v211 = vld [vmem:[%s198 + $0x8] sm:$0x1f]
      %v212 = vld [vmem:[%s1] sm:$0xff]
      %v213 = vld [vmem:[%s1 + $0x8] sm:$0xff]
      %s214 = scalar_lea.vmem %s198, 16
      %v215 = vld [vmem:[%s214] sm:$0xff]
      %v216 = vld [vmem:[%s214 + $0x8] sm:$0x1f]
      %s217 = scalar_lea.vmem %s1, 16
      %v218 = vld [vmem:[%s217] sm:$0xff]
      %v219 = vld [vmem:[%s217 + $0x8] sm:$0xff]
      %vm220 = vcmask 130048
      %v222 = vsel %vm220, %v215, 0
      %v225 = vsel %vm220, %v216, 0
      %227 = vmatprep.subr.mxu0 0.0
      %228 = vmatpush1.msra.mxu0 %v218
      %229 = vmatprep.subr.mxu0 0.0
      %230 = vmatpush1.msra.mxu0 %v219
      %231 = vmatprep.subr.mxu0 0.0
      %232 = vmatpush1.msra.mxu0 0.0
      %233 = vmatprep.subr.mxu0 0.0
      %234 = vmatpush1.msra.mxu0 0.0
      %235 = vmatprep.subr.mxu0 0.0
      %236 = vmatpush1.msra.mxu0 0.0
      %237 = vmatprep.subr.mxu0 0.0
      %238 = vmatpush1.msra.mxu0 0.0
      %239 = vmatprep.subr.mxu0 0.0
      %240 = vmatpush1.msra.mxu0 0.0
      %241 = vmatprep.subr.mxu0 0.0
      %242 = vmatpush1.msra.mxu0 0.0
      %243 = vmatprep.subr.mxu0 0.0
      %244 = vmatpush1.msra.mxu0 0.0
      %245 = vmatprep.subr.mxu0 0.0
      %246 = vmatpush1.msra.mxu0 0.0
      %247 = vmatprep.subr.mxu0 0.0
      %248 = vmatpush1.msra.mxu0 0.0
      %249 = vmatprep.subr.mxu0 0.0
      %250 = vmatpush1.msra.mxu0 0.0
      %251 = vmatprep.subr.mxu0 0.0
      %252 = vmatpush1.msra.mxu0 0.0
      %253 = vmatprep.subr.mxu0 0.0
      %254 = vmatpush1.msra.mxu0 0.0
      %255 = vmatprep.subr.mxu0 0.0
      %256 = vmatpush1.msra.mxu0 0.0
      %257 = vmatprep.subr.mxu0 0.0
      %258 = vmatpush1.msra.mxu0 0.0
      %259 = vmatprep.subr.mxu0 0.0
      %260 = vmatpush1.msra.mxu0 0.0
      %261 = vmatprep.subr.mxu0 0.0
      %262 = vmatpush1.msra.mxu0 0.0
      %263 = vmatprep.subr.mxu0 0.0
      %264 = vmatpush1.msra.mxu0 0.0
      %265 = vmatprep.subr.mxu0 0.0
      %266 = vmatpush1.msra.mxu0 0.0
      %267 = vmatprep.subr.mxu0 0.0
      %268 = vmatpush1.msra.mxu0 0.0
      %269 = vmatprep.subr.mxu0 0.0
      %270 = vmatpush1.msra.mxu0 0.0
      %271 = vmatprep.subr.mxu0 0.0
      %272 = vmatpush1.msra.mxu0 0.0
      %273 = vmatprep.subr.mxu0 0.0
      %274 = vmatpush1.msra.mxu0 0.0
      %275 = vmatprep.subr.mxu0 0.0
      %276 = vmatpush1.msra.mxu0 0.0
      %277 = vmatprep.subr.mxu0 0.0
      %278 = vmatpush1.msra.mxu0 0.0
      %279 = vmatprep.subr.mxu0 0.0
      %280 = vmatpush1.msra.mxu0 0.0
      %281 = vmatprep.subr.mxu0 0.0
      %282 = vmatpush1.msra.mxu0 0.0
      %283 = vmatprep.subr.mxu0 0.0
      %284 = vmatpush1.msra.mxu0 0.0
      %285 = vmatprep.subr.mxu0 0.0
      %286 = vmatpush1.msra.mxu0 0.0
      %287 = vmatprep.subr.mxu0 0.0
      %288 = vmatpush1.msra.mxu0 0.0
      %289 = vmatprep.subr.mxu0 0.0
      %290 = vmatpush1.msra.mxu0 0.0
      %291 = vmatprep.mubr.f32.mxu0 0.0
      %292 = vmatmul.mubr.f32.gmra.mrb[0].mxu0 %v222
      %v293 = vpop.f32.mrb[0].mxu0
      %v294 = vadd.f32 0.0, %v293
      %v295 = vpop.f32.mrb[0].mxu0
      %296 = vmatprep.mubr.f32.mxu0 0.0
      %297 = vmatmul.mubr.f32.gmra.mrb[0].mxu0 %v225
      %v298 = vpop.f32.mrb[0].mxu0
      %v299 = vadd.f32 0.0, %v298
      %v300 = vpop.f32.mrb[0].mxu0
      %301 = vdwg.mxu0
      %v303 = vsel %vm220, %v210, 0
      %v306 = vsel %vm220, %v211, 0
      %308 = vmatprep.subr.mxu0 0.0
      %309 = vmatpush1.msra.mxu0 %v212
      %310 = vmatprep.subr.mxu0 0.0
      %311 = vmatpush1.msra.mxu0 %v213
      %312 = vmatprep.subr.mxu0 0.0
      %313 = vmatpush1.msra.mxu0 0.0
      %314 = vmatprep.subr.mxu0 0.0
      %315 = vmatpush1.msra.mxu0 0.0
      %316 = vmatprep.subr.mxu0 0.0
      %317 = vmatpush1.msra.mxu0 0.0
      %318 = vmatprep.subr.mxu0 0.0
      %319 = vmatpush1.msra.mxu0 0.0
      %320 = vmatprep.subr.mxu0 0.0
      %321 = vmatpush1.msra.mxu0 0.0
      %322 = vmatprep.subr.mxu0 0.0
      %323 = vmatpush1.msra.mxu0 0.0
      %324 = vmatprep.subr.mxu0 0.0
      %325 = vmatpush1.msra.mxu0 0.0
      %326 = vmatprep.subr.mxu0 0.0
      %327 = vmatpush1.msra.mxu0 0.0
      %328 = vmatprep.subr.mxu0 0.0
      %329 = vmatpush1.msra.mxu0 0.0
      %330 = vmatprep.subr.mxu0 0.0
      %331 = vmatpush1.msra.mxu0 0.0
      %332 = vmatprep.subr.mxu0 0.0
      %333 = vmatpush1.msra.mxu0 0.0
      %334 = vmatprep.subr.mxu0 0.0
      %335 = vmatpush1.msra.mxu0 0.0
      %336 = vmatprep.subr.mxu0 0.0
      %337 = vmatpush1.msra.mxu0 0.0
      %338 = vmatprep.subr.mxu0 0.0
      %339 = vmatpush1.msra.mxu0 0.0
      %340 = vmatprep.subr.mxu0 0.0
      %341 = vmatpush1.msra.mxu0 0.0
      %342 = vmatprep.subr.mxu0 0.0
      %343 = vmatpush1.msra.mxu0 0.0
      %344 = vmatprep.subr.mxu0 0.0
      %345 = vmatpush1.msra.mxu0 0.0
      %346 = vmatprep.subr.mxu0 0.0
      %347 = vmatpush1.msra.mxu0 0.0
      %348 = vmatprep.subr.mxu0 0.0
      %349 = vmatpush1.msra.mxu0 0.0
      %350 = vmatprep.subr.mxu0 0.0
      %351 = vmatpush1.msra.mxu0 0.0
      %352 = vmatprep.subr.mxu0 0.0
      %353 = vmatpush1.msra.mxu0 0.0
      %354 = vmatprep.subr.mxu0 0.0
      %355 = vmatpush1.msra.mxu0 0.0
      %356 = vmatprep.subr.mxu0 0.0
      %357 = vmatpush1.msra.mxu0 0.0
      %358 = vmatprep.subr.mxu0 0.0
      %359 = vmatpush1.msra.mxu0 0.0
      %360 = vmatprep.subr.mxu0 0.0
      %361 = vmatpush1.msra.mxu0 0.0
      %362 = vmatprep.subr.mxu0 0.0
      %363 = vmatpush1.msra.mxu0 0.0
      %364 = vmatprep.subr.mxu0 0.0
      %365 = vmatpush1.msra.mxu0 0.0
      %366 = vmatprep.subr.mxu0 0.0
      %367 = vmatpush1.msra.mxu0 0.0
      %368 = vmatprep.subr.mxu0 0.0
      %369 = vmatpush1.msra.mxu0 0.0
      %370 = vmatprep.subr.mxu0 0.0
      %371 = vmatpush1.msra.mxu0 0.0
      %372 = vmatprep.mubr.f32.mxu0 0.0
      %373 = vmatmul.mubr.f32.gmra.mrb[0].mxu0 %v303
      %v374 = vpop.f32.mrb[0].mxu0
      %v375 = vadd.f32 %v294, %v374
      %v376 = vpop.f32.mrb[0].mxu0
      %377 = vmatprep.mubr.f32.mxu0 0.0
      %378 = vmatmul.mubr.f32.gmra.mrb[0].mxu0 %v306
      %v379 = vpop.f32.mrb[0].mxu0
      %v380 = vadd.f32 %v299, %v379
      %v381 = vpop.f32.mrb[0].mxu0
      %382 = vdwg.mxu0
      %s383 = scalar_lea.vmem %s198, 32
      %v384 = vld [vmem:[%s383] sm:$0xff]
      %v385 = vld [vmem:[%s383 + $0x8] sm:$0x1f]
      %s386 = scalar_lea.vmem %s1, 32
      %v387 = vld [vmem:[%s386] sm:$0xff]
      %v388 = vld [vmem:[%s386 + $0x8] sm:$0xff]
      %v390 = vsel %vm220, %v384, 0
      %v393 = vsel %vm220, %v385, 0
      %395 = vmatprep.subr.mxu0 0.0
      %396 = vmatpush1.msra.mxu0 %v387
      %397 = vmatprep.subr.mxu0 0.0
      %398 = vmatpush1.msra.mxu0 %v388
      %399 = vmatprep.subr.mxu0 0.0
      %400 = vmatpush1.msra.mxu0 0.0
      %401 = vmatprep.subr.mxu0 0.0
      %402 = vmatpush1.msra.mxu0 0.0
      %403 = vmatprep.subr.mxu0 0.0
      %404 = vmatpush1.msra.mxu0 0.0
      %405 = vmatprep.subr.mxu0 0.0
      %406 = vmatpush1.msra.mxu0 0.0
      %407 = vmatprep.subr.mxu0 0.0
      %408 = vmatpush1.msra.mxu0 0.0
      %409 = vmatprep.subr.mxu0 0.0
      %410 = vmatpush1.msra.mxu0 0.0
      %411 = vmatprep.subr.mxu0 0.0
      %412 = vmatpush1.msra.mxu0 0.0
      %413 = vmatprep.subr.mxu0 0.0
      %414 = vmatpush1.msra.mxu0 0.0
      %415 = vmatprep.subr.mxu0 0.0
      %416 = vmatpush1.msra.mxu0 0.0
      %417 = vmatprep.subr.mxu0 0.0
      %418 = vmatpush1.msra.mxu0 0.0
      %419 = vmatprep.subr.mxu0 0.0
      %420 = vmatpush1.msra.mxu0 0.0
      %421 = vmatprep.subr.mxu0 0.0
      %422 = vmatpush1.msra.mxu0 0.0
      %423 = vmatprep.subr.mxu0 0.0
      %424 = vmatpush1.msra.mxu0 0.0
      %425 = vmatprep.subr.mxu0 0.0
      %426 = vmatpush1.msra.mxu0 0.0
      %427 = vmatprep.subr.mxu0 0.0
      %428 = vmatpush1.msra.mxu0 0.0
      %429 = vmatprep.subr.mxu0 0.0
      %430 = vmatpush1.msra.mxu0 0.0
      %431 = vmatprep.subr.mxu0 0.0
      %432 = vmatpush1.msra.mxu0 0.0
      %433 = vmatprep.subr.mxu0 0.0
      %434 = vmatpush1.msra.mxu0 0.0
      %435 = vmatprep.subr.mxu0 0.0
      %436 = vmatpush1.msra.mxu0 0.0
      %437 = vmatprep.subr.mxu0 0.0
      %438 = vmatpush1.msra.mxu0 0.0
      %439 = vmatprep.subr.mxu0 0.0
      %440 = vmatpush1.msra.mxu0 0.0
      %441 = vmatprep.subr.mxu0 0.0
      %442 = vmatpush1.msra.mxu0 0.0
      %443 = vmatprep.subr.mxu0 0.0
      %444 = vmatpush1.msra.mxu0 0.0
      %445 = vmatprep.subr.mxu0 0.0
      %446 = vmatpush1.msra.mxu0 0.0
      %447 = vmatprep.subr.mxu0 0.0
      %448 = vmatpush1.msra.mxu0 0.0
      %449 = vmatprep.subr.mxu0 0.0
      %450 = vmatpush1.msra.mxu0 0.0
      %451 = vmatprep.subr.mxu0 0.0
      %452 = vmatpush1.msra.mxu0 0.0
      %453 = vmatprep.subr.mxu0 0.0
      %454 = vmatpush1.msra.mxu0 0.0
      %455 = vmatprep.subr.mxu0 0.0
      %456 = vmatpush1.msra.mxu0 0.0
      %457 = vmatprep.subr.mxu0 0.0
      %458 = vmatpush1.msra.mxu0 0.0
      %459 = vmatprep.mubr.f32.mxu0 0.0
      %460 = vmatmul.mubr.f32.gmra.mrb[0].mxu0 %v390
      %v461 = vpop.f32.mrb[0].mxu0
      %v462 = vadd.f32 0.0, %v461
      %v463 = vpop.f32.mrb[0].mxu0
      %464 = vmatprep.mubr.f32.mxu0 0.0
      %465 = vmatmul.mubr.f32.gmra.mrb[0].mxu0 %v393
      %v466 = vpop.f32.mrb[0].mxu0
      %v467 = vadd.f32 0.0, %v466
      %v468 = vpop.f32.mrb[0].mxu0
      %469 = vdwg.mxu0
      %v470 = vadd.f32 %v375, %v462
      %v471 = vadd.f32 %v380, %v467
      %v472 = vld [vmem:[%s2] sm:$0x1]
      %v474 = vlaneseq
      %v475 = vshrl.u32 %v474, 7
      %v476 = vsub.s32 0, %v475
      %v477 = vrot.slane %v472, %v476
      %v479 = vadd.f32 %v470, %v477
      %v480 = vadd.f32 %v471, %v477
      %481 = vst [vmem:[%s208] sm:$0xff] %v479
      %482 = vst [vmem:[%s208 + $0x8] sm:$0x1f] %v480
      %s483 = smul.u32 2, %s19
      %p484 = scmp.lt.s32.totalorder %s18, 1
      %s485 = scalar_select %p484, %s18, 1
      %p486 = scmp.lt.s32.totalorder %s483, 1
      %s487 = scalar_select %p486, %s483, 1
      %s488 = smul.addr %s485, 2
      %s489 = sadd.s32 %s487, %s488
      %s490 = smul.addr %s489, 8
      %s491 = scalar_lea.vmem %s3, %s490
      // Predicated region
      $region33: #{tpu_custom_call.1} parent=31 // pred_check
        %p492 = pneg %p116
      $region34: #{tpu_custom_call.1} parent=31 // pred_check_branch
        %494 = sbr.rel (%p492) target = $region36
      $region35: #{tpu_custom_call.1} parent=31 // pred_region
        %s495 = smul.u32 2, %s19
      $region36: #{tpu_custom_call.1} parent=31 // pred_fallthru
        _
    $region32: #{tpu_custom_call.1} parent=5 // pred_fallthru
      _
    %p496 = scmp.le.s32.totalorder 2, %s9
    // Predicated region
    $region37: #{tpu_custom_call.1} parent=5 // pred_check
      %p497 = pneg %p496
    $region38: #{tpu_custom_call.1} parent=5 // pred_check_branch
      %499 = sbr.rel (%p497) target = $region40
    $region39: #{tpu_custom_call.1} parent=5 // pred_region
      %s500 = ssub.s32 %s9, 2
      // Predicated region
      $region41: #{tpu_custom_call.1} parent=39 // pred_check
        %p501 = pneg %p122
      $region42: #{tpu_custom_call.1} parent=39 // pred_check_branch
        %503 = sbr.rel (%p501) target = $region44
      $region43: #{tpu_custom_call.1} parent=39 // pred_region
        %s504 = smul.u32 2, %s21
        %p505 = scmp.lt.s32.totalorder %s20, 1
        %s506 = scalar_select %p505, %s20, 1
        %p507 = scmp.lt.s32.totalorder %s504, 1
        %s508 = scalar_select %p507, %s504, 1
        %s509 = smul.addr %s506, 2
        %s510 = sadd.s32 %s508, %s509
        %s511 = smul.addr %s510, 8
        %s512 = scalar_lea.vmem %s3, %s511
      $region44: #{tpu_custom_call.1} parent=39 // pred_fallthru
        _
    $region40: #{tpu_custom_call.1} parent=5 // pred_fallthru
      _
  $region6: #{tpu_custom_call.1} parent=0 // loop_footer
    %s13 = sadd.s32 1, %s9
  $region7: #{tpu_custom_call.1} parent=0 // loop_footer_branch
    %8 = sbr.rel target = $region3
  $region8: #{tpu_custom_call.1} parent=0 // loop_exit
    _

</llo_original>
